<compile_context>
chip_gen: v5e
topology: v5e:2x2
jax: 0.10.0
libtpu: 0.0.40
codegen_flags: <defaults>
</compile_context>

<pallas_src>
import jax
import jax.numpy as jnp
from jax.experimental import pallas as pl
from jax.experimental.pallas import tpu as pltpu

LANE = 128     # lane width (last dim)
SUBLANE = 8    # f32 sublane width (second-to-last dim)
TILE_B = 512   # batch tile for large batches (amortizes ~0.35us/step overhead)


def _round_up(n, m):
    return ((n + m - 1) // m) * m


def _mlp_kernel(x_ref, w1_ref, b1_ref, w2_ref, b2_ref, w3_ref, b3_ref, out_ref):
    # x arrives f32; cast to bf16 only as an MXU operand (cheap VPU convert).
    x = x_ref[...].astype(jnp.bfloat16)

    # Layer 1: Linear (bf16 operands, f32 accumulate) + bias/ReLU in f32.
    h1 = jnp.dot(x, w1_ref[...], preferred_element_type=jnp.float32) + b1_ref[...]
    h1 = jnp.maximum(h1, 0.0).astype(jnp.bfloat16)

    # Layer 2: Linear + ReLU.
    h2 = jnp.dot(h1, w2_ref[...], preferred_element_type=jnp.float32) + b2_ref[...]
    h2 = jnp.maximum(h2, 0.0).astype(jnp.bfloat16)

    # Layer 3: Linear (no activation). Result is f32 -> store directly (lane-dense).
    out_ref[...] = jnp.dot(h2, w3_ref[...], preferred_element_type=jnp.float32) + b3_ref[...]


def init_params(key, input_size, hidden_size, output_size):
    """PyTorch-convention params: weight (out, in), bias (out,), all f32."""
    k1, k2, k3, k4, k5, k6 = jax.random.split(key, 6)
    s1 = 1.0 / jnp.sqrt(input_size)
    s2 = 1.0 / jnp.sqrt(hidden_size)
    return {
        "w1": jax.random.uniform(k1, (hidden_size, input_size), jnp.float32, -s1, s1),
        "b1": jax.random.uniform(k2, (hidden_size,), jnp.float32, -s1, s1),
        "w2": jax.random.uniform(k3, (hidden_size, hidden_size), jnp.float32, -s2, s2),
        "b2": jax.random.uniform(k4, (hidden_size,), jnp.float32, -s2, s2),
        "w3": jax.random.uniform(k5, (output_size, hidden_size), jnp.float32, -s2, s2),
        "b3": jax.random.uniform(k6, (output_size,), jnp.float32, -s2, s2),
    }


def prepare_params(params, compute_dtype=jnp.bfloat16):
    """One-time prep: transpose to (in, out), zero-pad lane dims to 128, cast
    weights to bf16, keep biases f32 as (1, padded). Result is device-resident
    and reused across calls (no per-call transpose/reshape/pad/cast ops)."""
    hidden, input_size = params["w1"].shape
    output_size = params["w3"].shape[0]
    h_pad = _round_up(hidden, LANE)
    o_pad = _round_up(output_size, LANE)

    w1t = jnp.zeros((input_size, h_pad), compute_dtype)
    w1t = w1t.at[:, :hidden].set(params["w1"].T.astype(compute_dtype))
    w2t = jnp.zeros((h_pad, h_pad), compute_dtype)
    w2t = w2t.at[:hidden, :hidden].set(params["w2"].T.astype(compute_dtype))
    w3t = jnp.zeros((h_pad, o_pad), compute_dtype)
    w3t = w3t.at[:hidden, :output_size].set(params["w3"].T.astype(compute_dtype))

    b1 = jnp.zeros((1, h_pad), jnp.float32).at[0, :hidden].set(params["b1"])
    b2 = jnp.zeros((1, h_pad), jnp.float32).at[0, :hidden].set(params["b2"])
    b3 = jnp.zeros((1, o_pad), jnp.float32).at[0, :output_size].set(params["b3"])

    return {
        "w1t": w1t, "b1": b1, "w2t": w2t, "b2": b2, "w3t": w3t, "b3": b3,
        "input_size": input_size, "hidden_size": hidden, "output_size": output_size,
    }


def neural_net_forward(x, prep):
    """Fused 3-layer MLP forward in a single Pallas kernel.

    Args:
      x: (batch, input_size) f32.
      prep: output of prepare_params().
    Returns:
      (batch, output_size) f32 logits.
    """
    batch = x.shape[0]
    input_size = prep["input_size"]
    output_size = prep["output_size"]
    h_pad = prep["w1t"].shape[1]
    o_pad = prep["w3t"].shape[1]

    # Batch tiling: multiple of 8 sublanes; TILE_B rows per step for big batches.
    tb = TILE_B if batch >= TILE_B else _round_up(batch, SUBLANE)
    batch_pad = _round_up(batch, tb)
    if batch_pad != batch:
        x = jnp.pad(x, ((0, batch_pad - batch), (0, 0)))
    grid = (batch_pad // tb,)

    flops = 2 * batch_pad * (input_size * h_pad + h_pad * h_pad + h_pad * o_pad)
    bytes_accessed = (
        batch_pad * input_size * 4
        + (prep["w1t"].size + prep["w2t"].size + prep["w3t"].size) * 2
        + (prep["b1"].size + prep["b2"].size + prep["b3"].size) * 4
        + batch_pad * o_pad * 4
    )

    out = pl.pallas_call(
        _mlp_kernel,
        out_shape=jax.ShapeDtypeStruct((batch_pad, o_pad), jnp.float32),
        grid_spec=pltpu.PrefetchScalarGridSpec(
            num_scalar_prefetch=0,
            grid=grid,
            in_specs=[
                pl.BlockSpec((tb, input_size), lambda i: (i, 0)),       # x tile
                pl.BlockSpec((input_size, h_pad), lambda i: (0, 0)),    # w1 (resident)
                pl.BlockSpec((1, h_pad), lambda i: (0, 0)),             # b1
                pl.BlockSpec((h_pad, h_pad), lambda i: (0, 0)),         # w2
                pl.BlockSpec((1, h_pad), lambda i: (0, 0)),             # b2
                pl.BlockSpec((h_pad, o_pad), lambda i: (0, 0)),         # w3
                pl.BlockSpec((1, o_pad), lambda i: (0, 0)),             # b3
            ],
            out_specs=pl.BlockSpec((tb, o_pad), lambda i: (i, 0)),      # lane-dense output
        ),
        compiler_params=pltpu.CompilerParams(
            dimension_semantics=("parallel",)),
        cost_estimate=pl.CostEstimate(
            flops=int(flops), transcendentals=0, bytes_accessed=int(bytes_accessed)),
    )(x, prep["w1t"], prep["b1"], prep["w2t"], prep["b2"], prep["w3t"], prep["b3"])

    return out[:batch, :output_size]


def _reference_forward(x, p):
    """Pure-JAX f32 reference mirroring the PyTorch module."""
    h = jnp.maximum(x @ p["w1"].T + p["b1"], 0.0)
    h = jnp.maximum(h @ p["w2"].T + p["b2"], 0.0)
    return h @ p["w3"].T + p["b3"]


if __name__ == "__main__":
    batch = 8
    input_size = 64      # e.g. bag-of-words vocabulary size
    hidden_size = 32
    output_size = 16     # number of intents/tags

    key = jax.random.PRNGKey(0)
    k_x, k_p = jax.random.split(key)
    x = jax.random.normal(k_x, (batch, input_size), jnp.float32)
    params = init_params(k_p, input_size, hidden_size, output_size)

    # One-time weight prep (transpose + pad + bf16 cast); reused across calls.
    prep = prepare_params(params)
    prep = {k: (jax.block_until_ready(v) if isinstance(v, jax.Array) else v)
            for k, v in prep.items()}

    out = neural_net_forward(x, prep)
    out = jax.block_until_ready(out)

    ref = _reference_forward(x, params)
    assert out.shape == (batch, output_size)
    # bf16 matmul operands -> loosened tolerance vs the f32 reference.
    assert jnp.allclose(out, ref, atol=3e-2, rtol=3e-2), "Pallas output mismatch vs reference"

    print("KERNEL_OK")
</pallas_src>

<mosaic_0001>
module attributes {stable_mosaic.version = 11 : i64} {
  func.func @_mlp_kernel(%arg0: i32, %arg1: memref<8x64xf32, #tpu.memory_space<vmem>>, %arg2: memref<64x128xbf16, #tpu.memory_space<vmem>>, %arg3: memref<1x128xf32, #tpu.memory_space<vmem>>, %arg4: memref<128x128xbf16, #tpu.memory_space<vmem>>, %arg5: memref<1x128xf32, #tpu.memory_space<vmem>>, %arg6: memref<128x128xbf16, #tpu.memory_space<vmem>>, %arg7: memref<1x128xf32, #tpu.memory_space<vmem>>, %arg8: memref<8x128xf32, #tpu.memory_space<vmem>>) attributes {dimension_semantics = [#tpu.dimension_semantics<parallel>], iteration_bounds = array<i64: 1>, scalar_prefetch = 0 : i64, scratch_operands = 0 : i64, tpu.core_type = #tpu.core_type<tc>, window_params = [{transform_indices = @transform_0, window_bounds = array<i64: 8, 64>}, {pipeline_mode = #tpu.pipeline_mode<synchronous>, transform_indices = @transform_1, window_bounds = array<i64: 64, 128>}, {pipeline_mode = #tpu.pipeline_mode<synchronous>, transform_indices = @transform_2, window_bounds = array<i64: 1, 128>}, {pipeline_mode = #tpu.pipeline_mode<synchronous>, transform_indices = @transform_3, window_bounds = array<i64: 128, 128>}, {pipeline_mode = #tpu.pipeline_mode<synchronous>, transform_indices = @transform_4, window_bounds = array<i64: 1, 128>}, {pipeline_mode = #tpu.pipeline_mode<synchronous>, transform_indices = @transform_5, window_bounds = array<i64: 128, 128>}, {pipeline_mode = #tpu.pipeline_mode<synchronous>, transform_indices = @transform_6, window_bounds = array<i64: 1, 128>}, {transform_indices = @transform_7, window_bounds = array<i64: 8, 128>}]} {
    %c0 = arith.constant 0 : index
    %c0_0 = arith.constant 0 : index
    %0 = vector.load %arg1[%c0, %c0_0] : memref<8x64xf32, #tpu.memory_space<vmem>>, vector<8x64xf32>
    %1 = arith.truncf %0 : vector<8x64xf32> to vector<8x64xbf16>
    %c0_1 = arith.constant 0 : index
    %c0_2 = arith.constant 0 : index
    %2 = vector.load %arg2[%c0_1, %c0_2] : memref<64x128xbf16, #tpu.memory_space<vmem>>, vector<64x128xbf16>
    %cst = arith.constant dense<0.000000e+00> : vector<8x128xf32>
    %3 = tpu.matmul %1, %2, %cst {dimension_numbers = #tpu.dot_dimension_numbers<[1], [0], [0], [1], [0, 0, 1, 1], [], []>} : vector<8x64xbf16>, vector<64x128xbf16>, vector<8x128xf32> -> vector<8x128xf32>
    %c0_3 = arith.constant 0 : index
    %c0_4 = arith.constant 0 : index
    %4 = vector.load %arg3[%c0_3, %c0_4] : memref<1x128xf32, #tpu.memory_space<vmem>>, vector<1x128xf32>
    %5 = vector.broadcast %4 : vector<1x128xf32> to vector<8x128xf32>
    %6 = arith.addf %3, %5 : vector<8x128xf32>
    %cst_5 = arith.constant 0.000000e+00 : f32
    %7 = vector.broadcast %cst_5 : f32 to vector<8x128xf32>
    %8 = arith.maximumf %6, %7 : vector<8x128xf32>
    %9 = arith.truncf %8 : vector<8x128xf32> to vector<8x128xbf16>
    %c0_6 = arith.constant 0 : index
    %c0_7 = arith.constant 0 : index
    %10 = vector.load %arg4[%c0_6, %c0_7] : memref<128x128xbf16, #tpu.memory_space<vmem>>, vector<128x128xbf16>
    %cst_8 = arith.constant dense<0.000000e+00> : vector<8x128xf32>
    %11 = tpu.matmul %9, %10, %cst_8 {dimension_numbers = #tpu.dot_dimension_numbers<[1], [0], [0], [1], [0, 0, 1, 1], [], []>} : vector<8x128xbf16>, vector<128x128xbf16>, vector<8x128xf32> -> vector<8x128xf32>
    %c0_9 = arith.constant 0 : index
    %c0_10 = arith.constant 0 : index
    %12 = vector.load %arg5[%c0_9, %c0_10] : memref<1x128xf32, #tpu.memory_space<vmem>>, vector<1x128xf32>
    %13 = vector.broadcast %12 : vector<1x128xf32> to vector<8x128xf32>
    %14 = arith.addf %11, %13 : vector<8x128xf32>
    %cst_11 = arith.constant 0.000000e+00 : f32
    %15 = vector.broadcast %cst_11 : f32 to vector<8x128xf32>
    %16 = arith.maximumf %14, %15 : vector<8x128xf32>
    %17 = arith.truncf %16 : vector<8x128xf32> to vector<8x128xbf16>
    %c0_12 = arith.constant 0 : index
    %c0_13 = arith.constant 0 : index
    %18 = vector.load %arg6[%c0_12, %c0_13] : memref<128x128xbf16, #tpu.memory_space<vmem>>, vector<128x128xbf16>
    %cst_14 = arith.constant dense<0.000000e+00> : vector<8x128xf32>
    %19 = tpu.matmul %17, %18, %cst_14 {dimension_numbers = #tpu.dot_dimension_numbers<[1], [0], [0], [1], [0, 0, 1, 1], [], []>} : vector<8x128xbf16>, vector<128x128xbf16>, vector<8x128xf32> -> vector<8x128xf32>
    %c0_15 = arith.constant 0 : index
    %c0_16 = arith.constant 0 : index
    %20 = vector.load %arg7[%c0_15, %c0_16] : memref<1x128xf32, #tpu.memory_space<vmem>>, vector<1x128xf32>
    %21 = vector.broadcast %20 : vector<1x128xf32> to vector<8x128xf32>
    %22 = arith.addf %19, %21 : vector<8x128xf32>
    %c0_17 = arith.constant 0 : index
    %c0_18 = arith.constant 0 : index
    %23 = vector.load %arg8[%c0_17, %c0_18] : memref<8x128xf32, #tpu.memory_space<vmem>>, vector<8x128xf32>
    tpu.vector_store %arg8[%c0_17, %c0_18], %22 {strides = array<i32>} : memref<8x128xf32, #tpu.memory_space<vmem>>, vector<8x128xf32>,
    return
  }
  func.func @transform_0(%arg0: i32) -> (i32, i32) {
    %c0_i32 = arith.constant 0 : i32
    %c0_i32_0 = arith.constant 0 : i32
    return %arg0, %c0_i32 : i32, i32
  }
  func.func @transform_1(%arg0: i32) -> (i32, i32) {
    %c0_i32 = arith.constant 0 : i32
    %c0_i32_0 = arith.constant 0 : i32
    %c0_i32_1 = arith.constant 0 : i32
    return %c0_i32, %c0_i32_0 : i32, i32
  }
  func.func @transform_2(%arg0: i32) -> (i32, i32) {
    %c0_i32 = arith.constant 0 : i32
    %c0_i32_0 = arith.constant 0 : i32
    %c0_i32_1 = arith.constant 0 : i32
    return %c0_i32, %c0_i32_0 : i32, i32
  }
  func.func @transform_3(%arg0: i32) -> (i32, i32) {
    %c0_i32 = arith.constant 0 : i32
    %c0_i32_0 = arith.constant 0 : i32
    %c0_i32_1 = arith.constant 0 : i32
    return %c0_i32, %c0_i32_0 : i32, i32
  }
  func.func @transform_4(%arg0: i32) -> (i32, i32) {
    %c0_i32 = arith.constant 0 : i32
    %c0_i32_0 = arith.constant 0 : i32
    %c0_i32_1 = arith.constant 0 : i32
    return %c0_i32, %c0_i32_0 : i32, i32
  }
  func.func @transform_5(%arg0: i32) -> (i32, i32) {
    %c0_i32 = arith.constant 0 : i32
    %c0_i32_0 = arith.constant 0 : i32
    %c0_i32_1 = arith.constant 0 : i32
    return %c0_i32, %c0_i32_0 : i32, i32
  }
  func.func @transform_6(%arg0: i32) -> (i32, i32) {
    %c0_i32 = arith.constant 0 : i32
    %c0_i32_0 = arith.constant 0 : i32
    %c0_i32_1 = arith.constant 0 : i32
    return %c0_i32, %c0_i32_0 : i32, i32
  }
  func.func @transform_7(%arg0: i32) -> (i32, i32) {
    %c0_i32 = arith.constant 0 : i32
    %c0_i32_0 = arith.constant 0 : i32
    return %arg0, %c0_i32 : i32, i32
  }
}

</mosaic_0001>

<llo_original>
// kernel: tpu_custom_call.1
$region0: #{tpu_custom_call.1}
  #allocation0 [shape = 'u32[]', space=smem, size = 0x4, offset = 0x4, fixed_abs, tag = 'smem constant byte address 0x4 - core index']
  #allocation1 [shape = 'u32[72,128]{1,0:T(1,128)}', space=vmem, size = 0x9000, scoped, tag = 'internal scratch']
  %s0 = inlined_call_operand.hbm [shape: f32[8,64], index: 0, kind: input, shape index: {}]
  %s1 = inlined_call_operand.hbm [shape: bf16[64,128], index: 1, kind: input, shape index: {}]
  %s2 = inlined_call_operand.vmem [shape: f32[1,128], index: 2, kind: input, shape index: {}]
  %s3 = inlined_call_operand.hbm [shape: bf16[128,128], index: 3, kind: input, shape index: {}]
  %s4 = inlined_call_operand.vmem [shape: f32[1,128], index: 4, kind: input, shape index: {}]
  %s5 = inlined_call_operand.hbm [shape: bf16[128,128], index: 5, kind: input, shape index: {}]
  %s6 = inlined_call_operand.vmem [shape: f32[1,128], index: 6, kind: input, shape index: {}]
  %s7 = inlined_call_operand.hbm [shape: f32[8,128], index: 7, kind: output, shape index: {}]
  %s8 = sld [smem:[#allocation0]]
  $region54: #{tpu_custom_call.1} parent=0
    _
  %s10 = ssub.s32 1, %s8
  %s11 = scalar_select 0, %s10, %s8
  $region1: #{tpu_custom_call.1} parent=0
    #allocation2 [shape = 'u8[4096]{0}', space=vmem, size = 0x1000, scoped, tag = 'input window, operand 0, single buffered']
    #allocation3 [shape = 's32[1]{0}', space=sflag, size = 0x4, scoped, tag = 'scoped memory for tpu_custom_call.1']
    #allocation4 [shape = 's32[1]{0}', space=sflag, size = 0x4, scoped, tag = 'scoped memory for tpu_custom_call.1']
    #allocation5 [shape = 'u8[16384]{0}', space=vmem, size = 0x4000, scoped, tag = 'input window, operand 1, single buffered']
    #allocation6 [shape = 's32[1]{0}', space=sflag, size = 0x4, scoped, tag = 'scoped memory for tpu_custom_call.1']
    #allocation7 [shape = 'u8[32768]{0}', space=vmem, size = 0x8000, scoped, tag = 'input window, operand 3, single buffered']
    #allocation8 [shape = 'u8[32768]{0}', space=vmem, size = 0x8000, scoped, tag = 'input window, operand 5, single buffered']
    #allocation9 [shape = 's32[1]{0}', space=sflag, size = 0x4, scoped, tag = 'scoped memory for tpu_custom_call.1']
    #allocation10 [shape = 'u8[4096]{0}', space=vmem, size = 0x1000, scoped, tag = 'output window, operand 0, single buffered']
    %12 = vsyncpa [#allocation3], 0
    %13 = vsyncpa [#allocation6], 0
    %14 = vsyncpa [#allocation9], 0
    %15 = vsyncpa [#allocation4], 0
    // Predicated region
    $region2: #{tpu_custom_call.1} parent=1 // pred_check
      _
    $region3: #{tpu_custom_call.1} parent=1 // pred_check_branch
      %17 = sbr.rel (0) target = $region5
    $region4: #{tpu_custom_call.1} parent=1 // pred_region
      %19 = vsyncadd [#allocation3], 0
      %s21 = sshll.u32 %s0, 4
      %s22 = int_to_ptr.hbm [resolvable:$true] %s21
      %s23 = sshll.u32 [#allocation2], 4
      %s24 = int_to_ptr.vmem [resolvable:$true] %s23
      %26 = dma.hbm_to_vmem [thread:$0]  %s22, 128, %s24, [#allocation3]
    $region5: #{tpu_custom_call.1} parent=1 // pred_fallthru
      _
    // Predicated region
    $region6: #{tpu_custom_call.1} parent=1 // pred_check
      _
    $region7: #{tpu_custom_call.1} parent=1 // pred_check_branch
      %28 = sbr.rel (0) target = $region9
    $region8: #{tpu_custom_call.1} parent=1 // pred_region
      %30 = vsyncadd [#allocation6], 0
      %s31 = sshll.u32 %s1, 4
      %s32 = int_to_ptr.hbm [resolvable:$true] %s31
      %s33 = sshll.u32 [#allocation5], 4
      %s34 = int_to_ptr.vmem [resolvable:$true] %s33
      %39 = dma.hbm_to_vmem [thread:$0]  %s32, 512, %s34, [#allocation6], 64, 64, 4
    $region9: #{tpu_custom_call.1} parent=1 // pred_fallthru
      _
    // Predicated region
    $region10: #{tpu_custom_call.1} parent=1 // pred_check
      _
    $region11: #{tpu_custom_call.1} parent=1 // pred_check_branch
      %41 = sbr.rel (0) target = $region13
    $region12: #{tpu_custom_call.1} parent=1 // pred_region
      _
    $region13: #{tpu_custom_call.1} parent=1 // pred_fallthru
      _
    // Predicated region
    $region14: #{tpu_custom_call.1} parent=1 // pred_check
      _
    $region15: #{tpu_custom_call.1} parent=1 // pred_check_branch
      %43 = sbr.rel (0) target = $region17
    $region16: #{tpu_custom_call.1} parent=1 // pred_region
      %45 = vsyncadd [#allocation6], 0
      %s46 = sshll.u32 %s3, 4
      %s47 = int_to_ptr.hbm [resolvable:$true] %s46
      %s48 = sshll.u32 [#allocation7], 4
      %s49 = int_to_ptr.vmem [resolvable:$true] %s48
      %54 = dma.hbm_to_vmem [thread:$0]  %s47, 1024, %s49, [#allocation6], 64, 64, 4
    $region17: #{tpu_custom_call.1} parent=1 // pred_fallthru
      _
    // Predicated region
    $region18: #{tpu_custom_call.1} parent=1 // pred_check
      _
    $region19: #{tpu_custom_call.1} parent=1 // pred_check_branch
      %56 = sbr.rel (0) target = $region21
    $region20: #{tpu_custom_call.1} parent=1 // pred_region
      _
    $region21: #{tpu_custom_call.1} parent=1 // pred_fallthru
      _
    // Predicated region
    $region22: #{tpu_custom_call.1} parent=1 // pred_check
      _
    $region23: #{tpu_custom_call.1} parent=1 // pred_check_branch
      %58 = sbr.rel (0) target = $region25
    $region24: #{tpu_custom_call.1} parent=1 // pred_region
      %60 = vsyncadd [#allocation9], 0
      %s61 = sshll.u32 %s5, 4
      %s62 = int_to_ptr.hbm [resolvable:$true] %s61
      %s63 = sshll.u32 [#allocation8], 4
      %s64 = int_to_ptr.vmem [resolvable:$true] %s63
      %69 = dma.hbm_to_vmem [thread:$0]  %s62, 1024, %s64, [#allocation9], 64, 64, 4
    $region25: #{tpu_custom_call.1} parent=1 // pred_fallthru
      _
    // Predicated region
    $region26: #{tpu_custom_call.1} parent=1 // pred_check
      _
    $region27: #{tpu_custom_call.1} parent=1 // pred_check_branch
      %71 = sbr.rel (0) target = $region29
    $region28: #{tpu_custom_call.1} parent=1 // pred_region
      _
    $region29: #{tpu_custom_call.1} parent=1 // pred_fallthru
      _
    // Predicated region
    $region30: #{tpu_custom_call.1} parent=1 // pred_check
      _
    $region31: #{tpu_custom_call.1} parent=1 // pred_check_branch
      %73 = sbr.rel (0) target = $region33
    $region32: #{tpu_custom_call.1} parent=1 // pred_region
      %75 = dma.done [#allocation3], 128
    $region33: #{tpu_custom_call.1} parent=1 // pred_fallthru
      _
    // Predicated region
    $region34: #{tpu_custom_call.1} parent=1 // pred_check
      _
    $region35: #{tpu_custom_call.1} parent=1 // pred_check_branch
      %77 = sbr.rel (0) target = $region37
    $region36: #{tpu_custom_call.1} parent=1 // pred_region
      %79 = dma.done [#allocation6], 512
    $region37: #{tpu_custom_call.1} parent=1 // pred_fallthru
      _
    // Predicated region
    $region38: #{tpu_custom_call.1} parent=1 // pred_check
      _
    $region39: #{tpu_custom_call.1} parent=1 // pred_check_branch
      %81 = sbr.rel (0) target = $region41
    $region40: #{tpu_custom_call.1} parent=1 // pred_region
      %83 = dma.done [#allocation6], 1024
    $region41: #{tpu_custom_call.1} parent=1 // pred_fallthru
      _
    // Predicated region
    $region42: #{tpu_custom_call.1} parent=1 // pred_check
      _
    $region43: #{tpu_custom_call.1} parent=1 // pred_check_branch
      %85 = sbr.rel (0) target = $region45
    $region44: #{tpu_custom_call.1} parent=1 // pred_region
      %87 = dma.done [#allocation9], 1024
    $region45: #{tpu_custom_call.1} parent=1 // pred_fallthru
      _
    %v89 = vld [vmem:[#allocation2] sm:$0xff]
    %v90 = vpack.c.bf16 %v89, %v89
    %v91 = vld [vmem:[#allocation5] sm:$0xf]
    %v92 = vld [vmem:[#allocation5 + $0x4] sm:$0xf]
    %v93 = vld [vmem:[#allocation5 + $0x8] sm:$0xf]
    %v94 = vld [vmem:[#allocation5 + $0xc] sm:$0xf]
    %v95 = vld [vmem:[#allocation5 + $0x10] sm:$0xf]
    %v96 = vld [vmem:[#allocation5 + $0x14] sm:$0xf]
    %v97 = vld [vmem:[#allocation5 + $0x18] sm:$0xf]
    %v98 = vld [vmem:[#allocation5 + $0x1c] sm:$0xf]
    %v99 = vld [vmem:[%s2] sm:$0x1]
    %v101 = vperm.slane %v99, 0
    %v111 = vunpack.c.l.b16 %v91
    %v112 = vunpack.c.l.b16 %v92
    %v113 = vunpack.c.l.b16 %v93
    %v114 = vunpack.c.l.b16 %v94
    %v115 = vunpack.c.l.b16 %v95
    %v116 = vunpack.c.l.b16 %v96
    %v117 = vunpack.c.l.b16 %v97
    %v118 = vunpack.c.l.b16 %v98
    %v119 = vpack.c.b16 %v112, %v111
    %v120 = vpack.c.b16 %v114, %v113
    %v121 = vpack.c.b16 %v116, %v115
    %v122 = vpack.c.b16 %v118, %v117
    %vm127 = vcmask 523264
    %v129 = vsel %vm127, %v90, 0
    %131 = vmatpush.bf16.msra.mxu0 0
    %132 = vmatpush.bf16.msra.mxu0 0
    %133 = vmatpush.bf16.msra.mxu0 0
    %134 = vmatpush.bf16.msra.mxu0 0
    %135 = vmatpush.bf16.msra.mxu0 %v122
    %136 = vmatpush.bf16.msra.mxu0 %v121
    %137 = vmatpush.bf16.msra.mxu0 %v120
    %138 = vmatpush.bf16.msra.mxu0 %v119
    %139 = vmatmul.bf16.gmra.mxu0 %v129
    %v140 = vpop.f32.mrf.mxu0
    %v141 = vadd.f32 %v101, %v140
    %v142 = vpop.f32.mrf.mxu0
    %143 = vdwg.mxu0
    %v144 = vmax.f32 %v141, 0.0
    %v145 = vpack.c.bf16 %v144, %v144
    %v146 = vld [vmem:[#allocation7] sm:$0xf]
    %v147 = vld [vmem:[#allocation7 + $0x4] sm:$0xf]
    %v148 = vld [vmem:[#allocation7 + $0x8] sm:$0xf]
    %v149 = vld [vmem:[#allocation7 + $0xc] sm:$0xf]
    %v150 = vld [vmem:[#allocation7 + $0x10] sm:$0xf]
    %v151 = vld [vmem:[#allocation7 + $0x14] sm:$0xf]
    %v152 = vld [vmem:[#allocation7 + $0x18] sm:$0xf]
    %v153 = vld [vmem:[#allocation7 + $0x1c] sm:$0xf]
    %v154 = vld [vmem:[#allocation7 + $0x20] sm:$0xf]
    %v155 = vld [vmem:[#allocation7 + $0x24] sm:$0xf]
    %v156 = vld [vmem:[#allocation7 + $0x28] sm:$0xf]
    %v157 = vld [vmem:[#allocation7 + $0x2c] sm:$0xf]
    %v158 = vld [vmem:[#allocation7 + $0x30] sm:$0xf]
    %v159 = vld [vmem:[#allocation7 + $0x34] sm:$0xf]
    %v160 = vld [vmem:[#allocation7 + $0x38] sm:$0xf]
    %v161 = vld [vmem:[#allocation7 + $0x3c] sm:$0xf]
    %v162 = vld [vmem:[%s4] sm:$0x1]
    %v164 = vperm.slane %v162, 0
    %v182 = vunpack.c.l.b16 %v146
    %v183 = vunpack.c.l.b16 %v147
    %v184 = vunpack.c.l.b16 %v148
    %v185 = vunpack.c.l.b16 %v149
    %v186 = vunpack.c.l.b16 %v150
    %v187 = vunpack.c.l.b16 %v151
    %v188 = vunpack.c.l.b16 %v152
    %v189 = vunpack.c.l.b16 %v153
    %v190 = vunpack.c.l.b16 %v154
    %v191 = vunpack.c.l.b16 %v155
    %v192 = vunpack.c.l.b16 %v156
    %v193 = vunpack.c.l.b16 %v157
    %v194 = vunpack.c.l.b16 %v158
    %v195 = vunpack.c.l.b16 %v159
    %v196 = vunpack.c.l.b16 %v160
    %v197 = vunpack.c.l.b16 %v161
    %v198 = vpack.c.b16 %v183, %v182
    %v199 = vpack.c.b16 %v185, %v184
    %v200 = vpack.c.b16 %v187, %v186
    %v201 = vpack.c.b16 %v189, %v188
    %v202 = vpack.c.b16 %v191, %v190
    %v203 = vpack.c.b16 %v193, %v192
    %v204 = vpack.c.b16 %v195, %v194
    %v205 = vpack.c.b16 %v197, %v196
    %214 = vmatpush.bf16.msra.mxu0 %v205
    %215 = vmatpush.bf16.msra.mxu0 %v204
    %216 = vmatpush.bf16.msra.mxu0 %v203
    %217 = vmatpush.bf16.msra.mxu0 %v202
    %218 = vmatpush.bf16.msra.mxu0 %v201
    %219 = vmatpush.bf16.msra.mxu0 %v200
    %220 = vmatpush.bf16.msra.mxu0 %v199
    %221 = vmatpush.bf16.msra.mxu0 %v198
    %222 = vmatmul.bf16.gmra.mxu0 %v145
    %v223 = vpop.f32.mrf.mxu0
    %v224 = vadd.f32 %v164, %v223
    %v225 = vpop.f32.mrf.mxu0
    %226 = vdwg.mxu0
    %v227 = vmax.f32 %v224, 0.0
    %v228 = vpack.c.bf16 %v227, %v227
    %v229 = vld [vmem:[#allocation8] sm:$0xf]
    %v230 = vld [vmem:[#allocation8 + $0x4] sm:$0xf]
    %v231 = vld [vmem:[#allocation8 + $0x8] sm:$0xf]
    %v232 = vld [vmem:[#allocation8 + $0xc] sm:$0xf]
    %v233 = vld [vmem:[#allocation8 + $0x10] sm:$0xf]
    %v234 = vld [vmem:[#allocation8 + $0x14] sm:$0xf]
    %v235 = vld [vmem:[#allocation8 + $0x18] sm:$0xf]
    %v236 = vld [vmem:[#allocation8 + $0x1c] sm:$0xf]
    %v237 = vld [vmem:[#allocation8 + $0x20] sm:$0xf]
    %v238 = vld [vmem:[#allocation8 + $0x24] sm:$0xf]
    %v239 = vld [vmem:[#allocation8 + $0x28] sm:$0xf]
    %v240 = vld [vmem:[#allocation8 + $0x2c] sm:$0xf]
    %v241 = vld [vmem:[#allocation8 + $0x30] sm:$0xf]
    %v242 = vld [vmem:[#allocation8 + $0x34] sm:$0xf]
    %v243 = vld [vmem:[#allocation8 + $0x38] sm:$0xf]
    %v244 = vld [vmem:[#allocation8 + $0x3c] sm:$0xf]
    %v245 = vld [vmem:[%s6] sm:$0x1]
    %v247 = vperm.slane %v245, 0
    %v265 = vunpack.c.l.b16 %v229
    %v266 = vunpack.c.l.b16 %v230
    %v267 = vunpack.c.l.b16 %v231
    %v268 = vunpack.c.l.b16 %v232
    %v269 = vunpack.c.l.b16 %v233
    %v270 = vunpack.c.l.b16 %v234
    %v271 = vunpack.c.l.b16 %v235
    %v272 = vunpack.c.l.b16 %v236
    %v273 = vunpack.c.l.b16 %v237
    %v274 = vunpack.c.l.b16 %v238
    %v275 = vunpack.c.l.b16 %v239
    %v276 = vunpack.c.l.b16 %v240
    %v277 = vunpack.c.l.b16 %v241
    %v278 = vunpack.c.l.b16 %v242
    %v279 = vunpack.c.l.b16 %v243
    %v280 = vunpack.c.l.b16 %v244
    %v281 = vpack.c.b16 %v266, %v265
    %v282 = vpack.c.b16 %v268, %v267
    %v283 = vpack.c.b16 %v270, %v269
    %v284 = vpack.c.b16 %v272, %v271
    %v285 = vpack.c.b16 %v274, %v273
    %v286 = vpack.c.b16 %v276, %v275
    %v287 = vpack.c.b16 %v278, %v277
    %v288 = vpack.c.b16 %v280, %v279
    %297 = vmatpush.bf16.msra.mxu0 %v288
    %298 = vmatpush.bf16.msra.mxu0 %v287
    %299 = vmatpush.bf16.msra.mxu0 %v286
    %300 = vmatpush.bf16.msra.mxu0 %v285
    %301 = vmatpush.bf16.msra.mxu0 %v284
    %302 = vmatpush.bf16.msra.mxu0 %v283
    %303 = vmatpush.bf16.msra.mxu0 %v282
    %304 = vmatpush.bf16.msra.mxu0 %v281
    %305 = vmatmul.bf16.gmra.mxu0 %v228
    %v306 = vpop.f32.mrf.mxu0
    %v307 = vadd.f32 %v247, %v306
    %v308 = vpop.f32.mrf.mxu0
    %309 = vdwg.mxu0
    %310 = vst [vmem:[#allocation10] sm:$0xff] %v307
    // Predicated region
    $region46: #{tpu_custom_call.1} parent=1 // pred_check
      _
    $region47: #{tpu_custom_call.1} parent=1 // pred_check_branch
      %312 = sbr.rel (0) target = $region49
    $region48: #{tpu_custom_call.1} parent=1 // pred_region
      %314 = vsyncadd [#allocation4], 0
      %s316 = sshll.u32 [#allocation10], 4
      %s317 = int_to_ptr.vmem [resolvable:$true] %s316
      %s318 = sshll.u32 %s7, 4
      %s319 = int_to_ptr.hbm [resolvable:$true] %s318
      %321 = dma.vmem_to_hbm [thread:$0]  %s317, 128, %s319, [#allocation4]
    $region49: #{tpu_custom_call.1} parent=1 // pred_fallthru
      _
    // Predicated region
    $region50: #{tpu_custom_call.1} parent=1 // pred_check
      _
    $region51: #{tpu_custom_call.1} parent=1 // pred_check_branch
      %323 = sbr.rel (0) target = $region53
    $region52: #{tpu_custom_call.1} parent=1 // pred_region
      %325 = dma.done [#allocation4], 128
    $region53: #{tpu_custom_call.1} parent=1 // pred_fallthru
      _
    %326 = vsyncpa [#allocation3], 1
    %327 = vsyncpa [#allocation6], 1
    %328 = vsyncpa [#allocation9], 1
    %329 = vsyncpa [#allocation4], 1

</llo_original>
